<compile_context>
chip_gen: v5e
topology: v5e:2x2
jax: 0.10.0
libtpu: 0.0.40
codegen_flags: <defaults>
</compile_context>

<pallas_src>
import jax
import jax.numpy as jnp
from jax.experimental import pallas as pl
from jax.experimental.pallas import tpu as pltpu

LANE = 128
SUBLANE = 8


def _round_up(n, m):
    return ((n + m - 1) // m) * m


def mlp_kernel(x_ref, w1t_ref, b1_ref, w2t_ref, b2_ref, o_ref):
    # Cast to the MXU compute dtype inside the kernel (x arrives as f32; fusing the cast
    # here avoids a separate wrapper-side HBM pass over x).
    x = x_ref[...].astype(w1t_ref.dtype)
    # fc1: (TB, in) @ (in, H) + (1, H), f32 accumulation on the MXU.
    h = jnp.dot(x, w1t_ref[...], preferred_element_type=jnp.float32)
    h = h + b1_ref[...]
    # dropout1: nn.Dropout(0.4) is identity in eval/inference mode.
    # TODO(synk): training-mode dropout would need pltpu.prng_seed + prng_random_bits masking.
    h = jnp.maximum(h, 0.0)
    # fc3: (TB, H) @ (H, C_pad) + (1, C_pad); feed the MXU in the compute dtype (bf16).
    out = jnp.dot(h.astype(w2t_ref.dtype), w2t_ref[...],
                  preferred_element_type=jnp.float32)
    out = out + b2_ref[...]
    o_ref[...] = out.astype(o_ref.dtype)


def prepare_params(w1, b1, w2, b2, compute_dtype=jnp.bfloat16):
    """One-time parameter prep (hoisted out of the per-call path).

    w1: (hidden, input_size), b1: (hidden,), w2: (num_classes, hidden), b2: (num_classes,)
    — same layout as PyTorch nn.Linear. Returns (params, num_classes).
    """
    num_classes, hidden = w2.shape
    c_pad = _round_up(num_classes, LANE)
    w1t = jnp.asarray(w1).T.astype(compute_dtype)                       # (in, H)
    b1r = jnp.asarray(b1, jnp.float32)[None, :]                         # (1, H)
    w2t = jnp.asarray(w2).T.astype(compute_dtype)                       # (H, C)
    w2t = jnp.pad(w2t, ((0, 0), (0, c_pad - num_classes)))              # (H, C_pad), zero cols
    b2r = jnp.pad(jnp.asarray(b2, jnp.float32),
                  (0, c_pad - num_classes))[None, :]                    # (1, C_pad), zero pad
    return (w1t, b1r, w2t, b2r), num_classes


def mlp_forward(x, params, num_classes, *, batch_tile=4096,
                out_dtype=jnp.float32, return_padded=False):
    """x: (B, input_size) f32. params from prepare_params().

    batch_tile: upper bound on the per-grid-step batch tile (2048-8192 amortizes the
      per-step overhead; 4096 fits comfortably in scoped VMEM on v5e/v6e/v7x).
    out_dtype: set jnp.bfloat16 to halve the dominant HBM write if downstream tolerates it.
    return_padded: return the (B_pad, 128) buffer unsliced (lets the consumer index it and
      avoids an extra full read of the output stream at large B).
    """
    w1t, b1r, w2t, b2r = params
    B, K = x.shape
    H = w1t.shape[1]
    C_pad = w2t.shape[1]

    # Batch tile: multiple of the 8-row sublane, capped at batch_tile. When the batch is
    # splittable, aim for >=2 grid steps so "parallel" semantics can use both v7x TCs.
    n_steps = max(pl.cdiv(B, batch_tile), 2) if B > SUBLANE else 1
    TB = min(_round_up(pl.cdiv(B, n_steps), SUBLANE), _round_up(batch_tile, SUBLANE))
    B_pad = _round_up(B, TB)
    xin = x
    if B_pad != B:
        xin = jnp.pad(xin, ((0, B_pad - B), (0, 0)))

    out_itemsize = jnp.dtype(out_dtype).itemsize
    w_itemsize = jnp.dtype(w1t.dtype).itemsize
    cost = pl.CostEstimate(
        flops=2 * B_pad * (K * H + H * C_pad),
        transcendentals=0,
        bytes_accessed=(B_pad * K * x.dtype.itemsize          # read x
                        + B_pad * C_pad * out_itemsize        # write out
                        + (K * H + H * C_pad) * w_itemsize    # weights
                        + (H + C_pad) * 4),                   # biases
    )

    out_pad = pl.pallas_call(
        mlp_kernel,
        out_shape=jax.ShapeDtypeStruct((B_pad, C_pad), out_dtype),
        grid=(B_pad // TB,),
        in_specs=[
            pl.BlockSpec((TB, K), lambda i: (i, 0)),       # x tile (f32), marches over batch
            pl.BlockSpec((K, H), lambda i: (0, 0)),        # w1t resident
            pl.BlockSpec((1, H), lambda i: (0, 0)),        # b1 resident
            pl.BlockSpec((H, C_pad), lambda i: (0, 0)),    # w2t (padded) resident
            pl.BlockSpec((1, C_pad), lambda i: (0, 0)),    # b2 (padded) resident
        ],
        out_specs=pl.BlockSpec((TB, C_pad), lambda i: (i, 0)),
        compiler_params=pltpu.CompilerParams(
            dimension_semantics=("parallel",),
            vmem_limit_bytes=32 * 1024 * 1024,
        ),
        cost_estimate=cost,
    )(xin, w1t, b1r, w2t, b2r)

    if return_padded:
        return out_pad
    return out_pad[:B, :num_classes].astype(x.dtype)


if __name__ == "__main__":
    # Small shapes consistent with the module: input_size=32, hidden_size1=128, num_classes=10.
    batch, input_size, hidden_size1, num_classes = 8, 32, 128, 10

    key = jax.random.PRNGKey(0)
    kx, kw1, kb1, kw2, kb2 = jax.random.split(key, 5)

    x = jax.random.normal(kx, (batch, input_size), dtype=jnp.float32)
    # Deterministic parameter init (PyTorch-like uniform fan-in bound).
    bound1 = 1.0 / (input_size ** 0.5)
    w1 = jax.random.uniform(kw1, (hidden_size1, input_size), jnp.float32, -bound1, bound1)
    b1 = jax.random.uniform(kb1, (hidden_size1,), jnp.float32, -bound1, bound1)
    bound2 = 1.0 / (hidden_size1 ** 0.5)
    w2 = jax.random.uniform(kw2, (num_classes, hidden_size1), jnp.float32, -bound2, bound2)
    b2 = jax.random.uniform(kb2, (num_classes,), jnp.float32, -bound2, bound2)

    params, n_cls = prepare_params(w1, b1, w2, b2)   # one-time (hoisted) prep
    out = mlp_forward(x, params, n_cls)
    jax.block_until_ready(out)

    # Reference in plain JAX mirroring the kernel's bf16-in / f32-accumulate math
    # (eval-mode dropout == identity).
    xb = x.astype(jnp.bfloat16).astype(jnp.float32)
    w1b = w1.astype(jnp.bfloat16).astype(jnp.float32)
    w2b = w2.astype(jnp.bfloat16).astype(jnp.float32)
    h_ref = jnp.maximum(xb @ w1b.T + b1, 0.0)
    h_ref = h_ref.astype(jnp.bfloat16).astype(jnp.float32)
    ref = h_ref @ w2b.T + b2

    assert out.shape == (batch, num_classes)
    assert jnp.allclose(out, ref, atol=1e-3, rtol=1e-3)
    # Sanity vs. full-f32 math (looser tolerance because of bf16 MXU inputs).
    ref_f32 = jnp.maximum(x @ w1.T + b1, 0.0) @ w2.T + b2
    assert jnp.allclose(out, ref_f32, atol=3e-2, rtol=3e-2)
    print("KERNEL_OK")
</pallas_src>

<mosaic_0001>
module attributes {stable_mosaic.version = 11 : i64} {
  func.func @mlp_kernel(%arg0: i32, %arg1: memref<8x32xf32, #tpu.memory_space<vmem>>, %arg2: memref<32x128xbf16, #tpu.memory_space<vmem>>, %arg3: memref<1x128xf32, #tpu.memory_space<vmem>>, %arg4: memref<128x128xbf16, #tpu.memory_space<vmem>>, %arg5: memref<1x128xf32, #tpu.memory_space<vmem>>, %arg6: memref<8x128xf32, #tpu.memory_space<vmem>>) attributes {dimension_semantics = [#tpu.dimension_semantics<parallel>], iteration_bounds = array<i64: 1>, scalar_prefetch = 0 : i64, scratch_operands = 0 : i64, tpu.core_type = #tpu.core_type<tc>, window_params = [{transform_indices = @transform_0, window_bounds = array<i64: 8, 32>}, {pipeline_mode = #tpu.pipeline_mode<synchronous>, transform_indices = @transform_1, window_bounds = array<i64: 32, 128>}, {pipeline_mode = #tpu.pipeline_mode<synchronous>, transform_indices = @transform_2, window_bounds = array<i64: 1, 128>}, {pipeline_mode = #tpu.pipeline_mode<synchronous>, transform_indices = @transform_3, window_bounds = array<i64: 128, 128>}, {pipeline_mode = #tpu.pipeline_mode<synchronous>, transform_indices = @transform_4, window_bounds = array<i64: 1, 128>}, {transform_indices = @transform_5, window_bounds = array<i64: 8, 128>}]} {
    %c0 = arith.constant 0 : index
    %c0_0 = arith.constant 0 : index
    %0 = vector.load %arg1[%c0, %c0_0] : memref<8x32xf32, #tpu.memory_space<vmem>>, vector<8x32xf32>
    %1 = arith.truncf %0 : vector<8x32xf32> to vector<8x32xbf16>
    %c0_1 = arith.constant 0 : index
    %c0_2 = arith.constant 0 : index
    %2 = vector.load %arg2[%c0_1, %c0_2] : memref<32x128xbf16, #tpu.memory_space<vmem>>, vector<32x128xbf16>
    %cst = arith.constant dense<0.000000e+00> : vector<8x128xf32>
    %3 = tpu.matmul %1, %2, %cst {dimension_numbers = #tpu.dot_dimension_numbers<[1], [0], [0], [1], [0, 0, 1, 1], [], []>} : vector<8x32xbf16>, vector<32x128xbf16>, vector<8x128xf32> -> vector<8x128xf32>
    %c0_3 = arith.constant 0 : index
    %c0_4 = arith.constant 0 : index
    %4 = vector.load %arg3[%c0_3, %c0_4] : memref<1x128xf32, #tpu.memory_space<vmem>>, vector<1x128xf32>
    %5 = vector.broadcast %4 : vector<1x128xf32> to vector<8x128xf32>
    %6 = arith.addf %3, %5 : vector<8x128xf32>
    %cst_5 = arith.constant 0.000000e+00 : f32
    %7 = vector.broadcast %cst_5 : f32 to vector<8x128xf32>
    %8 = arith.maximumf %6, %7 : vector<8x128xf32>
    %9 = arith.truncf %8 : vector<8x128xf32> to vector<8x128xbf16>
    %c0_6 = arith.constant 0 : index
    %c0_7 = arith.constant 0 : index
    %10 = vector.load %arg4[%c0_6, %c0_7] : memref<128x128xbf16, #tpu.memory_space<vmem>>, vector<128x128xbf16>
    %cst_8 = arith.constant dense<0.000000e+00> : vector<8x128xf32>
    %11 = tpu.matmul %9, %10, %cst_8 {dimension_numbers = #tpu.dot_dimension_numbers<[1], [0], [0], [1], [0, 0, 1, 1], [], []>} : vector<8x128xbf16>, vector<128x128xbf16>, vector<8x128xf32> -> vector<8x128xf32>
    %c0_9 = arith.constant 0 : index
    %c0_10 = arith.constant 0 : index
    %12 = vector.load %arg5[%c0_9, %c0_10] : memref<1x128xf32, #tpu.memory_space<vmem>>, vector<1x128xf32>
    %13 = vector.broadcast %12 : vector<1x128xf32> to vector<8x128xf32>
    %14 = arith.addf %11, %13 : vector<8x128xf32>
    %c0_11 = arith.constant 0 : index
    %c0_12 = arith.constant 0 : index
    %15 = vector.load %arg6[%c0_11, %c0_12] : memref<8x128xf32, #tpu.memory_space<vmem>>, vector<8x128xf32>
    tpu.vector_store %arg6[%c0_11, %c0_12], %14 {strides = array<i32>} : memref<8x128xf32, #tpu.memory_space<vmem>>, vector<8x128xf32>,
    return
  }
  func.func @transform_0(%arg0: i32) -> (i32, i32) {
    %c0_i32 = arith.constant 0 : i32
    %c0_i32_0 = arith.constant 0 : i32
    return %arg0, %c0_i32 : i32, i32
  }
  func.func @transform_1(%arg0: i32) -> (i32, i32) {
    %c0_i32 = arith.constant 0 : i32
    %c0_i32_0 = arith.constant 0 : i32
    %c0_i32_1 = arith.constant 0 : i32
    return %c0_i32, %c0_i32_0 : i32, i32
  }
  func.func @transform_2(%arg0: i32) -> (i32, i32) {
    %c0_i32 = arith.constant 0 : i32
    %c0_i32_0 = arith.constant 0 : i32
    %c0_i32_1 = arith.constant 0 : i32
    return %c0_i32, %c0_i32_0 : i32, i32
  }
  func.func @transform_3(%arg0: i32) -> (i32, i32) {
    %c0_i32 = arith.constant 0 : i32
    %c0_i32_0 = arith.constant 0 : i32
    %c0_i32_1 = arith.constant 0 : i32
    return %c0_i32, %c0_i32_0 : i32, i32
  }
  func.func @transform_4(%arg0: i32) -> (i32, i32) {
    %c0_i32 = arith.constant 0 : i32
    %c0_i32_0 = arith.constant 0 : i32
    %c0_i32_1 = arith.constant 0 : i32
    return %c0_i32, %c0_i32_0 : i32, i32
  }
  func.func @transform_5(%arg0: i32) -> (i32, i32) {
    %c0_i32 = arith.constant 0 : i32
    %c0_i32_0 = arith.constant 0 : i32
    return %arg0, %c0_i32 : i32, i32
  }
}

</mosaic_0001>

<llo_original>
// kernel: tpu_custom_call.1
$region0: #{tpu_custom_call.1}
  #allocation0 [shape = 'u32[]', space=smem, size = 0x4, offset = 0x4, fixed_abs, tag = 'smem constant byte address 0x4 - core index']
  #allocation1 [shape = 'u32[72,128]{1,0:T(1,128)}', space=vmem, size = 0x9000, scoped, tag = 'internal scratch']
  %s0 = inlined_call_operand.hbm [shape: f32[8,32], index: 0, kind: input, shape index: {}]
  %s1 = inlined_call_operand.hbm [shape: bf16[32,128], index: 1, kind: input, shape index: {}]
  %s2 = inlined_call_operand.vmem [shape: f32[1,128], index: 2, kind: input, shape index: {}]
  %s3 = inlined_call_operand.hbm [shape: bf16[128,128], index: 3, kind: input, shape index: {}]
  %s4 = inlined_call_operand.vmem [shape: f32[1,128], index: 4, kind: input, shape index: {}]
  %s5 = inlined_call_operand.hbm [shape: f32[8,128], index: 5, kind: output, shape index: {}]
  %s6 = sld [smem:[#allocation0]]
  $region42: #{tpu_custom_call.1} parent=0
    _
  %s8 = ssub.s32 1, %s6
  %s9 = scalar_select 0, %s8, %s6
  $region1: #{tpu_custom_call.1} parent=0
    #allocation2 [shape = 'u8[4096]{0}', space=vmem, size = 0x1000, scoped, tag = 'input window, operand 0, single buffered']
    #allocation3 [shape = 's32[1]{0}', space=sflag, size = 0x4, scoped, tag = 'scoped memory for tpu_custom_call.1']
    #allocation4 [shape = 's32[1]{0}', space=sflag, size = 0x4, scoped, tag = 'scoped memory for tpu_custom_call.1']
    #allocation5 [shape = 'u8[8192]{0}', space=vmem, size = 0x2000, scoped, tag = 'input window, operand 1, single buffered']
    #allocation6 [shape = 's32[1]{0}', space=sflag, size = 0x4, scoped, tag = 'scoped memory for tpu_custom_call.1']
    #allocation7 [shape = 'u8[32768]{0}', space=vmem, size = 0x8000, scoped, tag = 'input window, operand 3, single buffered']
    #allocation8 [shape = 'u8[4096]{0}', space=vmem, size = 0x1000, scoped, tag = 'output window, operand 0, single buffered']
    %10 = vsyncpa [#allocation3], 0
    %11 = vsyncpa [#allocation6], 0
    %12 = vsyncpa [#allocation4], 0
    // Predicated region
    $region2: #{tpu_custom_call.1} parent=1 // pred_check
      _
    $region3: #{tpu_custom_call.1} parent=1 // pred_check_branch
      %14 = sbr.rel (0) target = $region5
    $region4: #{tpu_custom_call.1} parent=1 // pred_region
      %16 = vsyncadd [#allocation3], 0
      %s18 = sshll.u32 %s0, 4
      %s19 = int_to_ptr.hbm [resolvable:$true] %s18
      %s20 = sshll.u32 [#allocation2], 4
      %s21 = int_to_ptr.vmem [resolvable:$true] %s20
      %23 = dma.hbm_to_vmem [thread:$0]  %s19, 128, %s21, [#allocation3]
    $region5: #{tpu_custom_call.1} parent=1 // pred_fallthru
      _
    // Predicated region
    $region6: #{tpu_custom_call.1} parent=1 // pred_check
      _
    $region7: #{tpu_custom_call.1} parent=1 // pred_check_branch
      %25 = sbr.rel (0) target = $region9
    $region8: #{tpu_custom_call.1} parent=1 // pred_region
      %27 = vsyncadd [#allocation6], 0
      %s28 = sshll.u32 %s1, 4
      %s29 = int_to_ptr.hbm [resolvable:$true] %s28
      %s30 = sshll.u32 [#allocation5], 4
      %s31 = int_to_ptr.vmem [resolvable:$true] %s30
      %36 = dma.hbm_to_vmem [thread:$0]  %s29, 256, %s31, [#allocation6], 64, 64, 4
    $region9: #{tpu_custom_call.1} parent=1 // pred_fallthru
      _
    // Predicated region
    $region10: #{tpu_custom_call.1} parent=1 // pred_check
      _
    $region11: #{tpu_custom_call.1} parent=1 // pred_check_branch
      %38 = sbr.rel (0) target = $region13
    $region12: #{tpu_custom_call.1} parent=1 // pred_region
      _
    $region13: #{tpu_custom_call.1} parent=1 // pred_fallthru
      _
    // Predicated region
    $region14: #{tpu_custom_call.1} parent=1 // pred_check
      _
    $region15: #{tpu_custom_call.1} parent=1 // pred_check_branch
      %40 = sbr.rel (0) target = $region17
    $region16: #{tpu_custom_call.1} parent=1 // pred_region
      %42 = vsyncadd [#allocation6], 0
      %s43 = sshll.u32 %s3, 4
      %s44 = int_to_ptr.hbm [resolvable:$true] %s43
      %s45 = sshll.u32 [#allocation7], 4
      %s46 = int_to_ptr.vmem [resolvable:$true] %s45
      %51 = dma.hbm_to_vmem [thread:$0]  %s44, 1024, %s46, [#allocation6], 64, 64, 4
    $region17: #{tpu_custom_call.1} parent=1 // pred_fallthru
      _
    // Predicated region
    $region18: #{tpu_custom_call.1} parent=1 // pred_check
      _
    $region19: #{tpu_custom_call.1} parent=1 // pred_check_branch
      %53 = sbr.rel (0) target = $region21
    $region20: #{tpu_custom_call.1} parent=1 // pred_region
      _
    $region21: #{tpu_custom_call.1} parent=1 // pred_fallthru
      _
    // Predicated region
    $region22: #{tpu_custom_call.1} parent=1 // pred_check
      _
    $region23: #{tpu_custom_call.1} parent=1 // pred_check_branch
      %55 = sbr.rel (0) target = $region25
    $region24: #{tpu_custom_call.1} parent=1 // pred_region
      %57 = dma.done [#allocation3], 128
    $region25: #{tpu_custom_call.1} parent=1 // pred_fallthru
      _
    // Predicated region
    $region26: #{tpu_custom_call.1} parent=1 // pred_check
      _
    $region27: #{tpu_custom_call.1} parent=1 // pred_check_branch
      %59 = sbr.rel (0) target = $region29
    $region28: #{tpu_custom_call.1} parent=1 // pred_region
      %61 = dma.done [#allocation6], 256
    $region29: #{tpu_custom_call.1} parent=1 // pred_fallthru
      _
    // Predicated region
    $region30: #{tpu_custom_call.1} parent=1 // pred_check
      _
    $region31: #{tpu_custom_call.1} parent=1 // pred_check_branch
      %63 = sbr.rel (0) target = $region33
    $region32: #{tpu_custom_call.1} parent=1 // pred_region
      %65 = dma.done [#allocation6], 1024
    $region33: #{tpu_custom_call.1} parent=1 // pred_fallthru
      _
    %v67 = vld [vmem:[#allocation2] sm:$0xff]
    %v68 = vpack.c.bf16 %v67, %v67
    %v69 = vld [vmem:[#allocation5] sm:$0xf]
    %v70 = vld [vmem:[#allocation5 + $0x4] sm:$0xf]
    %v71 = vld [vmem:[#allocation5 + $0x8] sm:$0xf]
    %v72 = vld [vmem:[#allocation5 + $0xc] sm:$0xf]
    %v73 = vld [vmem:[%s2] sm:$0x1]
    %v75 = vperm.slane %v73, 0
    %v81 = vunpack.c.l.b16 %v69
    %v82 = vunpack.c.l.b16 %v70
    %v83 = vunpack.c.l.b16 %v71
    %v84 = vunpack.c.l.b16 %v72
    %v85 = vpack.c.b16 %v82, %v81
    %v86 = vpack.c.b16 %v84, %v83
    %vm89 = vcmask 261120
    %v91 = vsel %vm89, %v68, 0
    %93 = vmatpush.bf16.msra.mxu0 0
    %94 = vmatpush.bf16.msra.mxu0 0
    %95 = vmatpush.bf16.msra.mxu0 0
    %96 = vmatpush.bf16.msra.mxu0 0
    %97 = vmatpush.bf16.msra.mxu0 0
    %98 = vmatpush.bf16.msra.mxu0 0
    %99 = vmatpush.bf16.msra.mxu0 %v86
    %100 = vmatpush.bf16.msra.mxu0 %v85
    %101 = vmatmul.bf16.gmra.mxu0 %v91
    %v102 = vpop.f32.mrf.mxu0
    %v103 = vadd.f32 %v75, %v102
    %v104 = vpop.f32.mrf.mxu0
    %105 = vdwg.mxu0
    %v106 = vmax.f32 %v103, 0.0
    %v107 = vpack.c.bf16 %v106, %v106
    %v108 = vld [vmem:[#allocation7] sm:$0xf]
    %v109 = vld [vmem:[#allocation7 + $0x4] sm:$0xf]
    %v110 = vld [vmem:[#allocation7 + $0x8] sm:$0xf]
    %v111 = vld [vmem:[#allocation7 + $0xc] sm:$0xf]
    %v112 = vld [vmem:[#allocation7 + $0x10] sm:$0xf]
    %v113 = vld [vmem:[#allocation7 + $0x14] sm:$0xf]
    %v114 = vld [vmem:[#allocation7 + $0x18] sm:$0xf]
    %v115 = vld [vmem:[#allocation7 + $0x1c] sm:$0xf]
    %v116 = vld [vmem:[#allocation7 + $0x20] sm:$0xf]
    %v117 = vld [vmem:[#allocation7 + $0x24] sm:$0xf]
    %v118 = vld [vmem:[#allocation7 + $0x28] sm:$0xf]
    %v119 = vld [vmem:[#allocation7 + $0x2c] sm:$0xf]
    %v120 = vld [vmem:[#allocation7 + $0x30] sm:$0xf]
    %v121 = vld [vmem:[#allocation7 + $0x34] sm:$0xf]
    %v122 = vld [vmem:[#allocation7 + $0x38] sm:$0xf]
    %v123 = vld [vmem:[#allocation7 + $0x3c] sm:$0xf]
    %v124 = vld [vmem:[%s4] sm:$0x1]
    %v126 = vperm.slane %v124, 0
    %v144 = vunpack.c.l.b16 %v108
    %v145 = vunpack.c.l.b16 %v109
    %v146 = vunpack.c.l.b16 %v110
    %v147 = vunpack.c.l.b16 %v111
    %v148 = vunpack.c.l.b16 %v112
    %v149 = vunpack.c.l.b16 %v113
    %v150 = vunpack.c.l.b16 %v114
    %v151 = vunpack.c.l.b16 %v115
    %v152 = vunpack.c.l.b16 %v116
    %v153 = vunpack.c.l.b16 %v117
    %v154 = vunpack.c.l.b16 %v118
    %v155 = vunpack.c.l.b16 %v119
    %v156 = vunpack.c.l.b16 %v120
    %v157 = vunpack.c.l.b16 %v121
    %v158 = vunpack.c.l.b16 %v122
    %v159 = vunpack.c.l.b16 %v123
    %v160 = vpack.c.b16 %v145, %v144
    %v161 = vpack.c.b16 %v147, %v146
    %v162 = vpack.c.b16 %v149, %v148
    %v163 = vpack.c.b16 %v151, %v150
    %v164 = vpack.c.b16 %v153, %v152
    %v165 = vpack.c.b16 %v155, %v154
    %v166 = vpack.c.b16 %v157, %v156
    %v167 = vpack.c.b16 %v159, %v158
    %176 = vmatpush.bf16.msra.mxu0 %v167
    %177 = vmatpush.bf16.msra.mxu0 %v166
    %178 = vmatpush.bf16.msra.mxu0 %v165
    %179 = vmatpush.bf16.msra.mxu0 %v164
    %180 = vmatpush.bf16.msra.mxu0 %v163
    %181 = vmatpush.bf16.msra.mxu0 %v162
    %182 = vmatpush.bf16.msra.mxu0 %v161
    %183 = vmatpush.bf16.msra.mxu0 %v160
    %184 = vmatmul.bf16.gmra.mxu0 %v107
    %v185 = vpop.f32.mrf.mxu0
    %v186 = vadd.f32 %v126, %v185
    %v187 = vpop.f32.mrf.mxu0
    %188 = vdwg.mxu0
    %189 = vst [vmem:[#allocation8] sm:$0xff] %v186
    // Predicated region
    $region34: #{tpu_custom_call.1} parent=1 // pred_check
      _
    $region35: #{tpu_custom_call.1} parent=1 // pred_check_branch
      %191 = sbr.rel (0) target = $region37
    $region36: #{tpu_custom_call.1} parent=1 // pred_region
      %193 = vsyncadd [#allocation4], 0
      %s195 = sshll.u32 [#allocation8], 4
      %s196 = int_to_ptr.vmem [resolvable:$true] %s195
      %s197 = sshll.u32 %s5, 4
      %s198 = int_to_ptr.hbm [resolvable:$true] %s197
      %200 = dma.vmem_to_hbm [thread:$0]  %s196, 128, %s198, [#allocation4]
    $region37: #{tpu_custom_call.1} parent=1 // pred_fallthru
      _
    // Predicated region
    $region38: #{tpu_custom_call.1} parent=1 // pred_check
      _
    $region39: #{tpu_custom_call.1} parent=1 // pred_check_branch
      %202 = sbr.rel (0) target = $region41
    $region40: #{tpu_custom_call.1} parent=1 // pred_region
      %204 = dma.done [#allocation4], 128
    $region41: #{tpu_custom_call.1} parent=1 // pred_fallthru
      _
    %205 = vsyncpa [#allocation3], 1
    %206 = vsyncpa [#allocation6], 1
    %207 = vsyncpa [#allocation4], 1

</llo_original>
